<compile_context>
chip_gen: v7x
topology: tpu7x:2x2x1
jax: 0.10.0
libtpu: 0.0.40
codegen_flags: <defaults>
</compile_context>

<pallas_src>
import functools

import jax
import jax.numpy as jnp
from jax import lax
from jax.experimental import pallas as pl
from jax.experimental.pallas import tpu as pltpu


def _hash_u32(x):
    """Cheap 2-round integer mixer (uint32 -> uint32). Pure jnp -> portable."""
    x = x ^ (x >> 16)
    x = x * jnp.uint32(0x7FEB352D)
    x = x ^ (x >> 15)
    x = x * jnp.uint32(0x846CA68B)
    x = x ^ (x >> 16)
    return x


def _residual_ln_kernel(seed_ref, x_ref, y_ref, gamma_ref, beta_ref, o_ref,
                        *, p: float, eps: float, size: int, block_rows: int):
    """One grid step: a (block_rows, size) slab of rows."""
    y = y_ref[...]

    # Dropout on the sublayer output (train-mode: keep w.p. 1-p, scale kept
    # values by 1/(1-p)).  p is static; counter-based hash keeps the RNG fully
    # inside the kernel with no extra HBM traffic and no TPU-only primitives.
    if p > 0.0:
        shp = y.shape
        row = lax.broadcasted_iota(jnp.int32, shp, 0).astype(jnp.uint32)
        col = lax.broadcasted_iota(jnp.int32, shp, 1).astype(jnp.uint32)
        grow = (pl.program_id(0) * block_rows).astype(jnp.uint32) + row
        lin = grow * jnp.uint32(size) + col               # unique per element
        seed_u = seed_ref[0].astype(jnp.uint32) * jnp.uint32(0x9E3779B9)
        bits = _hash_u32(lin ^ seed_u)
        # Integer-threshold keep test (31-bit, signed compare for portability).
        thr31 = jnp.int32(min(int(round(p * float(1 << 31))), (1 << 31) - 1))
        keep = (bits >> 1).astype(jnp.int32) >= thr31      # P(keep) = 1 - p
        y = jnp.where(keep, y * (1.0 / (1.0 - p)), 0.0)

    # Residual add.
    h = x_ref[...] + y

    # LayerNormalization:  a * (h - mean) / (std + eps) + b
    mean = jnp.mean(h, axis=-1, keepdims=True)
    d = h - mean
    # torch.std default is the unbiased estimator (ddof=1).
    var = jnp.sum(d * d, axis=-1, keepdims=True) * (1.0 / float(size - 1))
    std = jnp.sqrt(var)
    inv = 1.0 / (std + eps)                     # mem-bound; divide cost hidden
    scale = gamma_ref[...] * inv                # fold gamma into the per-row scale
    o_ref[...] = (d * scale + beta_ref[...]).astype(o_ref.dtype)


def _choose_block_rows(rows, d, itemsize=4, budget_bytes=24 << 20):
    """Largest row tile (multiple of 8) whose double-buffered working set
    (x, sublayer-out, out) fits a conservative VMEM budget (safe on v7x)."""
    max_rows = max(8, budget_bytes // (6 * d * itemsize))   # 2 bufs x 3 arrays
    br = min(1024, int(max_rows), rows)
    return max(8, (br // 8) * 8)


def residual_connection(x, sub_out, gamma, beta, *, dropout_p, seed,
                        eps=1e-6, block_rows=None):
    """LayerNorm(x + Dropout(sub_out)) via a Pallas TPU kernel.

    x, sub_out : (batch, seq, size) float32
    gamma, beta: (size,) float32  (LayerNormalization a_2 / b_2)
    """
    B, S, D = x.shape
    rows = B * S

    x2 = x.reshape(rows, D)
    y2 = sub_out.reshape(rows, D)
    g2 = gamma.reshape(1, D)
    b2 = beta.reshape(1, D)

    if block_rows is None:
        block_rows = _choose_block_rows(rows, D, x.dtype.itemsize)

    # Pad rows so the grid tiles evenly; padded rows produce finite values
    # (beta) and are sliced off below.
    padded = pl.cdiv(rows, block_rows) * block_rows
    if padded != rows:
        pad = padded - rows
        x2 = jnp.pad(x2, ((0, pad), (0, 0)))
        y2 = jnp.pad(y2, ((0, pad), (0, 0)))

    seed_arr = jnp.asarray([seed], dtype=jnp.int32)

    kernel = functools.partial(_residual_ln_kernel, p=float(dropout_p),
                               eps=float(eps), size=D, block_rows=block_rows)

    itemsize = x.dtype.itemsize
    vmem_needed = 2 * 3 * block_rows * D * itemsize + 4 * D * itemsize
    vmem_limit = int(min(96 << 20, max(2 * vmem_needed, 16 << 20)))

    out2 = pl.pallas_call(
        kernel,
        out_shape=jax.ShapeDtypeStruct((padded, D), x.dtype),
        grid_spec=pltpu.PrefetchScalarGridSpec(
            num_scalar_prefetch=1,          # seed lives in SMEM
            grid=(padded // block_rows,),
            in_specs=[
                pl.BlockSpec((block_rows, D), lambda i, seed: (i, 0)),  # x
                pl.BlockSpec((block_rows, D), lambda i, seed: (i, 0)),  # sublayer(x)
                pl.BlockSpec((1, D), lambda i, seed: (0, 0)),           # gamma
                pl.BlockSpec((1, D), lambda i, seed: (0, 0)),           # beta
            ],
            out_specs=pl.BlockSpec((block_rows, D), lambda i, seed: (i, 0)),
        ),
        compiler_params=pltpu.CompilerParams(
            dimension_semantics=("parallel",),   # no cross-step dep; uses both v7x TCs
            vmem_limit_bytes=vmem_limit),
    )(seed_arr, x2, y2, g2, b2)

    return out2[:rows].reshape(B, S, D)


def _reference_no_dropout(x, sub_out, gamma, beta, eps=1e-6):
    """Pure-JAX reference of forward() with dropout disabled (eval mode)."""
    h = x + sub_out
    mean = jnp.mean(h, axis=-1, keepdims=True)
    var = jnp.sum((h - mean) ** 2, axis=-1, keepdims=True) / (h.shape[-1] - 1)
    std = jnp.sqrt(var)
    return gamma * (h - mean) / (std + eps) + beta


if __name__ == "__main__":
    key = jax.random.PRNGKey(0)
    B, S, D = 2, 8, 32            # batch=2, seq=8, hidden(size)=32
    dropout_p = 0.1

    k_x, k_w, k_b = jax.random.split(key, 3)
    x = jax.random.normal(k_x, (B, S, D), dtype=jnp.float32)

    # Deterministic "sublayer": a small Linear(size, size) applied in plain JAX.
    # TODO(synk): when the sublayer is a known matmul, fuse it into the kernel
    # (K grid axis + f32 accumulator) to avoid materializing sub_out in HBM.
    w = jax.random.normal(k_w, (D, D), dtype=jnp.float32) * 0.05
    b = jax.random.normal(k_b, (D,), dtype=jnp.float32) * 0.05
    sub_out = x @ w + b

    # LayerNormalization parameters: a_2 = ones(size), b_2 = zeros(size).
    gamma = jnp.ones((D,), dtype=jnp.float32)
    beta = jnp.zeros((D,), dtype=jnp.float32)

    # 1) Correctness check with dropout disabled (eval-mode identity).
    out_eval = residual_connection(x, sub_out, gamma, beta,
                                   dropout_p=0.0, seed=0)
    out_eval = jax.block_until_ready(out_eval)
    ref = _reference_no_dropout(x, sub_out, gamma, beta)
    assert jnp.allclose(out_eval, ref, atol=1e-5, rtol=1e-5), (
        float(jnp.max(jnp.abs(out_eval - ref))))

    # 2) Train-mode forward with in-kernel integer-hash dropout.
    out_train = residual_connection(x, sub_out, gamma, beta,
                                    dropout_p=dropout_p, seed=1234)
    out_train = jax.block_until_ready(out_train)
    assert out_train.shape == (B, S, D)
    assert bool(jnp.all(jnp.isfinite(out_train)))

    print("KERNEL_OK")
</pallas_src>

<mosaic_0001>
module attributes {stable_mosaic.version = 11 : i64} {
  func.func @_residual_ln_kernel(%arg0: i32, %arg1: memref<1xi32, #tpu.memory_space<smem>>, %arg2: memref<16x32xf32, #tpu.memory_space<vmem>>, %arg3: memref<16x32xf32, #tpu.memory_space<vmem>>, %arg4: memref<1x32xf32, #tpu.memory_space<vmem>>, %arg5: memref<1x32xf32, #tpu.memory_space<vmem>>, %arg6: memref<16x32xf32, #tpu.memory_space<vmem>>) attributes {dimension_semantics = [#tpu.dimension_semantics<parallel>], iteration_bounds = array<i64: 1>, scalar_prefetch = 1 : i64, scratch_operands = 0 : i64, tpu.core_type = #tpu.core_type<tc>, window_params = [{transform_indices = @transform_0, window_bounds = array<i64: 16, 32>}, {transform_indices = @transform_1, window_bounds = array<i64: 16, 32>}, {pipeline_mode = #tpu.pipeline_mode<synchronous>, transform_indices = @transform_2, window_bounds = array<i64: 1, 32>}, {pipeline_mode = #tpu.pipeline_mode<synchronous>, transform_indices = @transform_3, window_bounds = array<i64: 1, 32>}, {transform_indices = @transform_4, window_bounds = array<i64: 16, 32>}]} {
    %c0 = arith.constant 0 : index
    %c0_0 = arith.constant 0 : index
    %0 = vector.load %arg3[%c0, %c0_0] : memref<16x32xf32, #tpu.memory_space<vmem>>, vector<16x32xf32>
    %c0_1 = arith.constant 0 : index
    %c0_2 = arith.constant 0 : index
    %1 = vector.load %arg2[%c0_1, %c0_2] : memref<16x32xf32, #tpu.memory_space<vmem>>, vector<16x32xf32>
    %2 = arith.addf %1, %0 : vector<16x32xf32>
    %cst = arith.constant dense<0.000000e+00> : vector<16xf32>
    %3 = vector.multi_reduction <add>, %2, %cst [1] : vector<16x32xf32> to vector<16xf32>
    %4 = vector.shape_cast %3 : vector<16xf32> to vector<16x1xf32>
    %cst_3 = arith.constant 3.200000e+01 : f32
    %5 = vector.broadcast %cst_3 : f32 to vector<16x1xf32>
    %6 = arith.divf %4, %5 : vector<16x1xf32>
    %7 = vector.broadcast %6 : vector<16x1xf32> to vector<16x32xf32>
    %8 = arith.subf %2, %7 : vector<16x32xf32>
    %9 = arith.mulf %8, %8 : vector<16x32xf32>
    %cst_4 = arith.constant dense<0.000000e+00> : vector<16xf32>
    %10 = vector.multi_reduction <add>, %9, %cst_4 [1] : vector<16x32xf32> to vector<16xf32>
    %11 = vector.shape_cast %10 : vector<16xf32> to vector<16x1xf32>
    %cst_5 = arith.constant 0.0322580636 : f32
    %12 = vector.broadcast %cst_5 : f32 to vector<16x1xf32>
    %13 = arith.mulf %11, %12 : vector<16x1xf32>
    %14 = math.sqrt %13 : vector<16x1xf32>
    %cst_6 = arith.constant 9.99999997E-7 : f32
    %15 = vector.broadcast %cst_6 : f32 to vector<16x1xf32>
    %16 = arith.addf %14, %15 : vector<16x1xf32>
    %cst_7 = arith.constant 1.000000e+00 : f32
    %17 = vector.broadcast %cst_7 : f32 to vector<16x1xf32>
    %18 = arith.divf %17, %16 : vector<16x1xf32>
    %c0_8 = arith.constant 0 : index
    %c0_9 = arith.constant 0 : index
    %19 = vector.load %arg4[%c0_8, %c0_9] : memref<1x32xf32, #tpu.memory_space<vmem>>, vector<1x32xf32>
    %20 = vector.broadcast %19 : vector<1x32xf32> to vector<16x32xf32>
    %21 = vector.broadcast %18 : vector<16x1xf32> to vector<16x32xf32>
    %22 = arith.mulf %20, %21 : vector<16x32xf32>
    %23 = arith.mulf %8, %22 : vector<16x32xf32>
    %c0_10 = arith.constant 0 : index
    %c0_11 = arith.constant 0 : index
    %24 = vector.load %arg5[%c0_10, %c0_11] : memref<1x32xf32, #tpu.memory_space<vmem>>, vector<1x32xf32>
    %25 = vector.broadcast %24 : vector<1x32xf32> to vector<16x32xf32>
    %26 = arith.addf %23, %25 : vector<16x32xf32>
    %c0_12 = arith.constant 0 : index
    %c0_13 = arith.constant 0 : index
    %27 = vector.load %arg6[%c0_12, %c0_13] : memref<16x32xf32, #tpu.memory_space<vmem>>, vector<16x32xf32>
    tpu.vector_store %arg6[%c0_12, %c0_13], %26 {strides = array<i32>} : memref<16x32xf32, #tpu.memory_space<vmem>>, vector<16x32xf32>,
    return
  }
  func.func @transform_0(%arg0: i32, %arg1: memref<1xi32, #tpu.memory_space<smem>>) -> (i32, i32) {
    %c0_i32 = arith.constant 0 : i32
    %c0_i32_0 = arith.constant 0 : i32
    return %arg0, %c0_i32 : i32, i32
  }
  func.func @transform_1(%arg0: i32, %arg1: memref<1xi32, #tpu.memory_space<smem>>) -> (i32, i32) {
    %c0_i32 = arith.constant 0 : i32
    %c0_i32_0 = arith.constant 0 : i32
    return %arg0, %c0_i32 : i32, i32
  }
  func.func @transform_2(%arg0: i32, %arg1: memref<1xi32, #tpu.memory_space<smem>>) -> (i32, i32) {
    %c0_i32 = arith.constant 0 : i32
    %c0_i32_0 = arith.constant 0 : i32
    %c0_i32_1 = arith.constant 0 : i32
    return %c0_i32, %c0_i32_0 : i32, i32
  }
  func.func @transform_3(%arg0: i32, %arg1: memref<1xi32, #tpu.memory_space<smem>>) -> (i32, i32) {
    %c0_i32 = arith.constant 0 : i32
    %c0_i32_0 = arith.constant 0 : i32
    %c0_i32_1 = arith.constant 0 : i32
    return %c0_i32, %c0_i32_0 : i32, i32
  }
  func.func @transform_4(%arg0: i32, %arg1: memref<1xi32, #tpu.memory_space<smem>>) -> (i32, i32) {
    %c0_i32 = arith.constant 0 : i32
    %c0_i32_0 = arith.constant 0 : i32
    return %arg0, %c0_i32 : i32, i32
  }
}

</mosaic_0001>

<llo_original>
// kernel: tpu_custom_call.1
$region0: #{tpu_custom_call.1}
  #allocation0 [shape = 'u32[]', space=smem, size = 0x4, offset = 0x4, fixed_abs, tag = 'smem constant byte address 0x4 - core index']
  #allocation1 [shape = 'u32[144,128]{1,0:T(1,128)}', space=vmem, size = 0x12000, scoped, tag = 'internal scratch']
  #allocation2 [shape = 's32[1]{0}', space=sflag, size = 0x4, scoped, tag = 'scoped memory for tpu_custom_call.1']
  #allocation3 [shape = 's32[1]{0:T(128)S(6)}', space=smem, size = 0x200, scoped, tag = 'prefetched SMEM operand 0']
  %s0 = inlined_call_operand.<no memory space> [shape: s32[1], index: 0, kind: input, shape index: {}]
  %s1 = inlined_call_operand.hbm [shape: f32[16,32], index: 1, kind: input, shape index: {}]
  %s2 = inlined_call_operand.hbm [shape: f32[16,32], index: 2, kind: input, shape index: {}]
  %s3 = inlined_call_operand.vmem [shape: f32[1,32], index: 3, kind: input, shape index: {}]
  %s4 = inlined_call_operand.vmem [shape: f32[1,32], index: 4, kind: input, shape index: {}]
  %s5 = inlined_call_operand.hbm [shape: f32[16,32], index: 5, kind: output, shape index: {}]
  %s6 = sld [smem:[#allocation0]]
  $region34: #{tpu_custom_call.1} parent=0
    _
  %s8 = ssub.s32 1, %s6
  %s9 = scalar_select 0, %s8, %s6
  %10 = sst [smem:[#allocation3]] %s0
  $region1: #{tpu_custom_call.1} parent=0
    #allocation4 [shape = 'u8[8192]{0}', space=vmem, size = 0x2000, scoped, tag = 'input window, operand 1, single buffered']
    #allocation5 [shape = 's32[1]{0}', space=sflag, size = 0x4, scoped, tag = 'scoped memory for tpu_custom_call.1']
    #allocation6 [shape = 's32[1]{0}', space=sflag, size = 0x4, scoped, tag = 'scoped memory for tpu_custom_call.1']
    #allocation7 [shape = 'u8[8192]{0}', space=vmem, size = 0x2000, scoped, tag = 'input window, operand 2, single buffered']
    #allocation8 [shape = 's32[1]{0}', space=sflag, size = 0x4, scoped, tag = 'scoped memory for tpu_custom_call.1']
    #allocation9 [shape = 'u8[8192]{0}', space=vmem, size = 0x2000, scoped, tag = 'output window, operand 0, single buffered']
    %11 = vsyncpa [#allocation5], 0
    %12 = vsyncpa [#allocation8], 0
    %13 = vsyncpa [#allocation6], 0
    // Predicated region
    $region2: #{tpu_custom_call.1} parent=1 // pred_check
      _
    $region3: #{tpu_custom_call.1} parent=1 // pred_check_branch
      %15 = sbr.rel (0) target = $region5
    $region4: #{tpu_custom_call.1} parent=1 // pred_region
      %s17 = ssub.s32 256, 256
      %18 = vsyncadd [#allocation5], %s17
      %s19 = sshll.u32 [#allocation4], 4
      %s20 = int_to_ptr.vmem [resolvable:$true] %s19
      %25 = dma.hbm_to_vmem [thread:$0]  %s1, 256, %s20, [#allocation5], 128, 128, 8
    $region5: #{tpu_custom_call.1} parent=1 // pred_fallthru
      _
    // Predicated region
    $region6: #{tpu_custom_call.1} parent=1 // pred_check
      _
    $region7: #{tpu_custom_call.1} parent=1 // pred_check_branch
      %27 = sbr.rel (0) target = $region9
    $region8: #{tpu_custom_call.1} parent=1 // pred_region
      %s29 = ssub.s32 256, 256
      %30 = vsyncadd [#allocation8], %s29
      %s31 = sshll.u32 [#allocation7], 4
      %s32 = int_to_ptr.vmem [resolvable:$true] %s31
      %37 = dma.hbm_to_vmem [thread:$0]  %s2, 256, %s32, [#allocation8], 128, 128, 8
    $region9: #{tpu_custom_call.1} parent=1 // pred_fallthru
      _
    // Predicated region
    $region10: #{tpu_custom_call.1} parent=1 // pred_check
      _
    $region11: #{tpu_custom_call.1} parent=1 // pred_check_branch
      %39 = sbr.rel (0) target = $region13
    $region12: #{tpu_custom_call.1} parent=1 // pred_region
      _
    $region13: #{tpu_custom_call.1} parent=1 // pred_fallthru
      _
    // Predicated region
    $region14: #{tpu_custom_call.1} parent=1 // pred_check
      _
    $region15: #{tpu_custom_call.1} parent=1 // pred_check_branch
      %41 = sbr.rel (0) target = $region17
    $region16: #{tpu_custom_call.1} parent=1 // pred_region
      _
    $region17: #{tpu_custom_call.1} parent=1 // pred_fallthru
      _
    // Predicated region
    $region18: #{tpu_custom_call.1} parent=1 // pred_check
      _
    $region19: #{tpu_custom_call.1} parent=1 // pred_check_branch
      %43 = sbr.rel (0) target = $region21
    $region20: #{tpu_custom_call.1} parent=1 // pred_region
      %44 = dma.done [#allocation5], 256
    $region21: #{tpu_custom_call.1} parent=1 // pred_fallthru
      _
    // Predicated region
    $region22: #{tpu_custom_call.1} parent=1 // pred_check
      _
    $region23: #{tpu_custom_call.1} parent=1 // pred_check_branch
      %46 = sbr.rel (0) target = $region25
    $region24: #{tpu_custom_call.1} parent=1 // pred_region
      %47 = dma.done [#allocation8], 256
    $region25: #{tpu_custom_call.1} parent=1 // pred_fallthru
      _
    %v48 = vld [vmem:[#allocation7] sm:$0xff]
    %v49 = vld [vmem:[#allocation7 + $0x8] sm:$0xff]
    %v50 = vld [vmem:[#allocation4] sm:$0xff]
    %v51 = vld [vmem:[#allocation4 + $0x8] sm:$0xff]
    %v52 = vadd.f32 %v50, %v48
    %v53 = vadd.f32 %v51, %v49
    %vm54 = vcmask 261120
    %v55 = vsel %vm54, %v52, 0.0
    %56 = vadd.xlane.f32.xlu0 %v55
    %v57 = vpop.xlane.xlu0 %56
    %v58 = vsel %vm54, %v53, 0.0
    %59 = vadd.xlane.f32.xlu0 %v58
    %v60 = vpop.xlane.xlu0 %59
    %v61 = vrcp.pop 32.0
    %v62 = vmul.f32 %v57, %v61
    %v63 = vmul.f32 %v60, %v61
    %v64 = vsub.f32 %v52, %v62
    %v65 = vsub.f32 %v53, %v63
    %v66 = vmul.f32 %v64, %v64
    %v67 = vmul.f32 %v65, %v65
    %v68 = vsel %vm54, %v66, 0.0
    %69 = vadd.xlane.f32.xlu0 %v68
    %v70 = vpop.xlane.xlu0 %69
    %v71 = vsel %vm54, %v67, 0.0
    %72 = vadd.xlane.f32.xlu0 %v71
    %v73 = vpop.xlane.xlu0 %72
    %v74 = vmul.f32 %v70, 0.032258064
    %v75 = vmul.f32 %v73, 0.032258064
    %v76 = vrsqrt.pop %v74
    %v77 = vmul.f32 %v74, %v76
    %vm78 = vcmp.eq.f32.partialorder %v74, inf
    %v79 = vsel %vm78, %v74, %v77
    %vm80 = vcmp.eq.f32.partialorder %v74, 0.0
    %v81 = vand.u32 %v74, 2147483648
    %v82 = vsel %vm80, %v81, %v79
    %v83 = vrsqrt.pop %v75
    %v84 = vmul.f32 %v75, %v83
    %vm85 = vcmp.eq.f32.partialorder %v75, inf
    %v86 = vsel %vm85, %v75, %v84
    %vm87 = vcmp.eq.f32.partialorder %v75, 0.0
    %v88 = vand.u32 %v75, 2147483648
    %v89 = vsel %vm87, %v88, %v86
    %v90 = vadd.f32 %v82, 1e-06
    %v91 = vadd.f32 %v89, 1e-06
    %v92 = vrcp.pop %v90
    %v93 = vmul.f32 1.0, %v92
    %v94 = vrcp.pop %v91
    %v95 = vmul.f32 1.0, %v94
    %v96 = vld [vmem:[%s3] sm:$0x1]
    %v98 = vlaneseq
    %v99 = vshrl.u32 %v98, 7
    %v100 = vsub.s32 0, %v99
    %v101 = vrot.slane %v96, %v100
    %v103 = vmul.f32 %v101, %v93
    %v104 = vmul.f32 %v101, %v95
    %v105 = vmul.f32 %v64, %v103
    %v106 = vmul.f32 %v65, %v104
    %v107 = vld [vmem:[%s4] sm:$0x1]
    %v109 = vlaneseq
    %v110 = vshrl.u32 %v109, 7
    %v111 = vsub.s32 0, %v110
    %v112 = vrot.slane %v107, %v111
    %v114 = vadd.f32 %v105, %v112
    %v115 = vadd.f32 %v106, %v112
    %116 = vst.msk [vmem:[#allocation9] sm:$0xff] %vm54, %v114
    %117 = vst.msk [vmem:[#allocation9 + $0x8] sm:$0xff] %vm54, %v115
    // Predicated region
    $region26: #{tpu_custom_call.1} parent=1 // pred_check
      _
    $region27: #{tpu_custom_call.1} parent=1 // pred_check_branch
      %119 = sbr.rel (0) target = $region29
    $region28: #{tpu_custom_call.1} parent=1 // pred_region
      %s121 = ssub.s32 256, 256
      %122 = vsyncadd [#allocation6], %s121
      %s123 = sshll.u32 [#allocation9], 4
      %s124 = int_to_ptr.vmem [resolvable:$true] %s123
      %129 = dma.vmem_to_hbm [thread:$0]  %s124, 256, %s5, [#allocation6], 128, 128, 8
    $region29: #{tpu_custom_call.1} parent=1 // pred_fallthru
      _
    // Predicated region
    $region30: #{tpu_custom_call.1} parent=1 // pred_check
      _
    $region31: #{tpu_custom_call.1} parent=1 // pred_check_branch
      %131 = sbr.rel (0) target = $region33
    $region32: #{tpu_custom_call.1} parent=1 // pred_region
      %132 = dma.done [#allocation6], 256
    $region33: #{tpu_custom_call.1} parent=1 // pred_fallthru
      _
    %133 = vsyncpa [#allocation5], 1
    %134 = vsyncpa [#allocation8], 1
    %135 = vsyncpa [#allocation6], 1

</llo_original>
